<compile_context>
chip_gen: v7x
topology: tpu7x:2x2x1
jax: 0.10.0
libtpu: 0.0.40
codegen_flags: <defaults>
</compile_context>

<pallas_src>
import math

import jax
import jax.numpy as jnp
from jax import lax
from jax.experimental import pallas as pl
from jax.experimental.pallas import tpu as pltpu

HIDDEN = 256


def critic_kernel(x_ref, w1_ref, b1_ref, w2_ref, b2_ref, o_ref):
    # fc1: MXU matmul, f32 accumulation. Operands were pre-cast in the wrapper, so the
    # VMEM-resident w1 block is NOT re-cast every grid step.
    h = jnp.dot(x_ref[...], w1_ref[...], preferred_element_type=jnp.float32)
    h = jnp.maximum(h + b1_ref[...], 0.0)            # (tb, 256) bias + ReLU in f32

    # fc2 (256 -> 1) as an NT matmul: (1, 256) . (tb, 256)^T -> (1, tb).
    # The per-row scalar lands directly in a lane-dense row, avoiding both an in-kernel
    # (tb,1)->(1,tb) relayout and masked (last-dim-1) partial stores.
    v = lax.dot_general(
        w2_ref[...], h,
        dimension_numbers=(((1,), (1,)), ((), ())),
        preferred_element_type=jnp.float32)           # (1, tb)
    v = v + b2_ref[0, 0]                              # scalar bias from SMEM

    # o_ref block is (1, 1, tb); o_ref[0] is the (1, tb) lane-dense row.
    o_ref[0] = v.astype(o_ref.dtype)


def critic_forward(x, w1, b1, w2_row, b2, *, block_batch=None, mxu_dtype=jnp.bfloat16):
    """y = relu(x @ w1 + b1) @ w2_row.T + b2, tiled over the batch dimension."""
    batch, state_dim = x.shape
    assert w1.shape == (state_dim, HIDDEN)
    assert b1.shape == (1, HIDDEN)
    assert w2_row.shape == (1, HIDDEN)
    assert b2.shape == (1, 1)

    # One-time casts in the wrapper (tiny ops): MXU operands in mxu_dtype, epilogue
    # math (bias / ReLU / fc2) in f32.
    x_in = x.astype(mxu_dtype)
    w1_in = w1.astype(mxu_dtype)
    b1_in = b1.astype(jnp.float32)
    w2_in = w2_row.astype(jnp.float32)
    b2_in = b2.astype(jnp.float32)

    itemsize = jnp.dtype(mxu_dtype).itemsize
    if block_batch is None:
        # ~8 MiB for the double-buffered x tile: fits every generation's scoped-VMEM
        # default (v5e 16 MiB ... v7x 32 MiB) with headroom for the resident weights,
        # and amortizes the ~0.35 us per-grid-step overhead. Scales down with state_dim.
        budget = 8 << 20
        block_batch = max(16, budget // (2 * state_dim * itemsize))
        block_batch = min(block_batch, 8192)

    tb = min(block_batch, batch)
    if tb < batch:
        # Prefer a multiple of 128 (lane-dense output row, MXU-friendly M); at minimum
        # a multiple of 16 (bf16 vregs pack (16, 128) sublanes).
        if tb >= 128:
            tb = (tb // 128) * 128
        else:
            tb = max(16, (tb // 16) * 16)
    num_tiles = pl.cdiv(batch, tb)

    out = pl.pallas_call(
        critic_kernel,
        out_shape=jax.ShapeDtypeStruct((num_tiles, 1, tb), jnp.float32),
        grid=(num_tiles,),
        in_specs=[
            # x: one (tb, state_dim) tile per grid step (auto double-buffered DMA).
            pl.BlockSpec((tb, state_dim), lambda i: (i, 0)),
            # Weights / b1 / w2: constant index_map -> VMEM-resident across the grid.
            pl.BlockSpec((state_dim, HIDDEN), lambda i: (0, 0)),
            pl.BlockSpec((1, HIDDEN), lambda i: (0, 0)),
            pl.BlockSpec((1, HIDDEN), lambda i: (0, 0)),
            # b2: single scalar in SMEM (no padded VMEM tile).
            pl.BlockSpec(memory_space=pltpu.MemorySpace.SMEM),
        ],
        out_specs=pl.BlockSpec((1, 1, tb), lambda i: (i, 0, 0)),
        compiler_params=pltpu.CompilerParams(
            # Batch tiles are independent -> shard across both TensorCores on v7x.
            dimension_semantics=("parallel",),
        ),
    )(x_in, w1_in, b1_in, w2_in, b2_in)

    # Lane-dense (num_tiles, 1, tb) slab -> (batch, 1).  Rows of the final partial tile
    # beyond `batch` were computed on padded x and are garbage; rows are independent so
    # they cannot contaminate valid outputs, and they are sliced off here.
    out = out.reshape(num_tiles * tb, 1)[:batch]
    return out.astype(x.dtype)


def init_params(key, state_dim, dtype=jnp.float32):
    """Deterministic init mimicking PyTorch nn.Linear default U(-1/sqrt(fan_in), +)."""
    k1, k2, k3, k4 = jax.random.split(key, 4)
    bound1 = 1.0 / math.sqrt(state_dim)
    w1 = jax.random.uniform(k1, (state_dim, HIDDEN), dtype, -bound1, bound1)
    b1 = jax.random.uniform(k2, (1, HIDDEN), dtype, -bound1, bound1)
    bound2 = 1.0 / math.sqrt(HIDDEN)
    w2_row = jax.random.uniform(k3, (1, HIDDEN), dtype, -bound2, bound2)  # fc2.weight layout
    b2 = jax.random.uniform(k4, (1, 1), dtype, -bound2, bound2)
    return w1, b1, w2_row, b2


if __name__ == "__main__":
    key = jax.random.PRNGKey(0)
    k_params, k_x, k_x2 = jax.random.split(key, 3)

    # Small demo shapes consistent with the module. NOTE: at this size the call is pure
    # launch overhead; in production batch many env states into one call.
    batch, state_dim = 16, 32
    w1, b1, w2_row, b2 = init_params(k_params, state_dim)
    x = jax.random.normal(k_x, (batch, state_dim), jnp.float32)

    out = jax.block_until_ready(critic_forward(x, w1, b1, w2_row, b2))
    assert out.shape == (batch, 1)

    # Reference with the *same* math as the kernel (bf16 MXU operands, f32 epilogue).
    h_m = jnp.maximum(
        jnp.dot(x.astype(jnp.bfloat16), w1.astype(jnp.bfloat16),
                preferred_element_type=jnp.float32) + b1, 0.0)
    ref_matched = jnp.sum(h_m * w2_row, axis=-1, keepdims=True) + b2[0, 0]
    assert jnp.allclose(out, ref_matched, atol=1e-3, rtol=1e-3)

    # Loose check against pure-f32 PyTorch-equivalent math (bf16 operand rounding).
    ref_f32 = jnp.maximum(x @ w1 + b1, 0.0) @ w2_row.T + b2
    assert jnp.allclose(out, ref_f32, atol=5e-2, rtol=5e-2)

    # f32 MXU path if closer parity with the PyTorch f32 Critic is required.
    out_f32 = jax.block_until_ready(
        critic_forward(x, w1, b1, w2_row, b2, mxu_dtype=jnp.float32))
    assert jnp.allclose(out_f32, ref_f32, atol=1e-3, rtol=1e-3)

    # Multi-tile path with a partial final tile (forces the batch grid + OOB padding).
    batch2 = 300
    x2 = jax.random.normal(k_x2, (batch2, state_dim), jnp.float32)
    out2 = jax.block_until_ready(
        critic_forward(x2, w1, b1, w2_row, b2, block_batch=128))
    ref2 = jnp.maximum(x2 @ w1 + b1, 0.0) @ w2_row.T + b2
    assert out2.shape == (batch2, 1)
    assert jnp.allclose(out2, ref2, atol=5e-2, rtol=5e-2)

    print("KERNEL_OK")
</pallas_src>

<mosaic_0001>
module attributes {stable_mosaic.version = 11 : i64} {
  func.func @critic_kernel(%arg0: i32, %arg1: memref<16x32xbf16, #tpu.memory_space<vmem>>, %arg2: memref<32x256xbf16, #tpu.memory_space<vmem>>, %arg3: memref<1x256xf32, #tpu.memory_space<vmem>>, %arg4: memref<1x256xf32, #tpu.memory_space<vmem>>, %arg5: memref<1x1xf32, #tpu.memory_space<smem>>, %arg6: memref<1x1x16xf32, #tpu.memory_space<vmem>>) attributes {dimension_semantics = [#tpu.dimension_semantics<parallel>], iteration_bounds = array<i64: 1>, scalar_prefetch = 0 : i64, scratch_operands = 0 : i64, tpu.core_type = #tpu.core_type<tc>, window_params = [{transform_indices = @transform_0, window_bounds = array<i64: 16, 32>}, {pipeline_mode = #tpu.pipeline_mode<synchronous>, transform_indices = @transform_1, window_bounds = array<i64: 32, 256>}, {pipeline_mode = #tpu.pipeline_mode<synchronous>, transform_indices = @transform_2, window_bounds = array<i64: 1, 256>}, {pipeline_mode = #tpu.pipeline_mode<synchronous>, transform_indices = @transform_3, window_bounds = array<i64: 1, 256>}, {transform_indices = @transform_4, window_bounds = array<i64: 1, 1>}, {transform_indices = @transform_5, window_bounds = array<i64: 1, 1, 16>}]} {
    %c0 = arith.constant 0 : index
    %c0_0 = arith.constant 0 : index
    %0 = vector.load %arg1[%c0, %c0_0] : memref<16x32xbf16, #tpu.memory_space<vmem>>, vector<16x32xbf16>
    %c0_1 = arith.constant 0 : index
    %c0_2 = arith.constant 0 : index
    %1 = vector.load %arg2[%c0_1, %c0_2] : memref<32x256xbf16, #tpu.memory_space<vmem>>, vector<32x256xbf16>
    %cst = arith.constant dense<0.000000e+00> : vector<16x256xf32>
    %2 = tpu.matmul %0, %1, %cst {dimension_numbers = #tpu.dot_dimension_numbers<[1], [0], [0], [1], [0, 0, 1, 1], [], []>} : vector<16x32xbf16>, vector<32x256xbf16>, vector<16x256xf32> -> vector<16x256xf32>
    %c0_3 = arith.constant 0 : index
    %c0_4 = arith.constant 0 : index
    %3 = vector.load %arg3[%c0_3, %c0_4] : memref<1x256xf32, #tpu.memory_space<vmem>>, vector<1x256xf32>
    %4 = vector.broadcast %3 : vector<1x256xf32> to vector<16x256xf32>
    %5 = arith.addf %2, %4 : vector<16x256xf32>
    %cst_5 = arith.constant 0.000000e+00 : f32
    %6 = vector.broadcast %cst_5 : f32 to vector<16x256xf32>
    %7 = arith.maximumf %5, %6 : vector<16x256xf32>
    %c0_6 = arith.constant 0 : index
    %c0_7 = arith.constant 0 : index
    %8 = vector.load %arg4[%c0_6, %c0_7] : memref<1x256xf32, #tpu.memory_space<vmem>>, vector<1x256xf32>
    %cst_8 = arith.constant dense<0.000000e+00> : vector<1x16xf32>
    %9 = tpu.matmul %8, %7, %cst_8 {dimension_numbers = #tpu.dot_dimension_numbers<[1], [1], [0], [0], [0, 0, 1, 0], [], []>} : vector<1x256xf32>, vector<16x256xf32>, vector<1x16xf32> -> vector<1x16xf32>
    %c0_9 = arith.constant 0 : index
    %c0_10 = arith.constant 0 : index
    %10 = memref.load %arg5[%c0_9, %c0_10] : memref<1x1xf32, #tpu.memory_space<smem>>
    %11 = vector.broadcast %10 : f32 to vector<1x16xf32>
    %12 = arith.addf %9, %11 : vector<1x16xf32>
    %c0_11 = arith.constant 0 : index
    %c0_12 = arith.constant 0 : index
    %c0_13 = arith.constant 0 : index
    %13 = vector.load %arg6[%c0_11, %c0_12, %c0_13] : memref<1x1x16xf32, #tpu.memory_space<vmem>>, vector<1x1x16xf32>
    %14 = vector.shape_cast %13 : vector<1x1x16xf32> to vector<1x16xf32>
    %15 = vector.shape_cast %12 : vector<1x16xf32> to vector<1x1x16xf32>
    tpu.vector_store %arg6[%c0_11, %c0_12, %c0_13], %15 {strides = array<i32>} : memref<1x1x16xf32, #tpu.memory_space<vmem>>, vector<1x1x16xf32>,
    return
  }
  func.func @transform_0(%arg0: i32) -> (i32, i32) {
    %c0_i32 = arith.constant 0 : i32
    %c0_i32_0 = arith.constant 0 : i32
    return %arg0, %c0_i32 : i32, i32
  }
  func.func @transform_1(%arg0: i32) -> (i32, i32) {
    %c0_i32 = arith.constant 0 : i32
    %c0_i32_0 = arith.constant 0 : i32
    %c0_i32_1 = arith.constant 0 : i32
    return %c0_i32, %c0_i32_0 : i32, i32
  }
  func.func @transform_2(%arg0: i32) -> (i32, i32) {
    %c0_i32 = arith.constant 0 : i32
    %c0_i32_0 = arith.constant 0 : i32
    %c0_i32_1 = arith.constant 0 : i32
    return %c0_i32, %c0_i32_0 : i32, i32
  }
  func.func @transform_3(%arg0: i32) -> (i32, i32) {
    %c0_i32 = arith.constant 0 : i32
    %c0_i32_0 = arith.constant 0 : i32
    %c0_i32_1 = arith.constant 0 : i32
    return %c0_i32, %c0_i32_0 : i32, i32
  }
  func.func @transform_4(%arg0: i32) -> (i32, i32) {
    %c0_i32 = arith.constant 0 : i32
    %c0_i32_0 = arith.constant 0 : i32
    %c0_i32_1 = arith.constant 0 : i32
    return %c0_i32, %c0_i32_0 : i32, i32
  }
  func.func @transform_5(%arg0: i32) -> (i32, i32, i32) {
    %c0_i32 = arith.constant 0 : i32
    %c0_i32_0 = arith.constant 0 : i32
    %c0_i32_1 = arith.constant 0 : i32
    return %arg0, %c0_i32, %c0_i32_0 : i32, i32, i32
  }
}

</mosaic_0001>

<llo_original>
// kernel: tpu_custom_call.1
$region0: #{tpu_custom_call.1}
  #allocation0 [shape = 'u32[]', space=smem, size = 0x4, offset = 0x4, fixed_abs, tag = 'smem constant byte address 0x4 - core index']
  #allocation1 [shape = 'u32[144,128]{1,0:T(1,128)}', space=vmem, size = 0x12000, scoped, tag = 'internal scratch']
  #allocation2 [shape = 'f32[1,1]{1,0:T(1,128)S(6)}', space=smem, size = 0x200, scoped, tag = 'scoped memory for tpu_custom_call.1']
  %s0 = inlined_call_operand.hbm [shape: bf16[16,32], index: 0, kind: input, shape index: {}]
  %s1 = inlined_call_operand.hbm [shape: bf16[32,256], index: 1, kind: input, shape index: {}]
  %s2 = inlined_call_operand.vmem [shape: f32[1,256], index: 2, kind: input, shape index: {}]
  %s3 = inlined_call_operand.vmem [shape: f32[1,256], index: 3, kind: input, shape index: {}]
  %s4 = inlined_call_operand.<no memory space> [shape: f32[1,1], index: 4, kind: input, shape index: {}]
  %s5 = inlined_call_operand.hbm [shape: f32[1,1,16], index: 5, kind: output, shape index: {}]
  %s6 = sld [smem:[#allocation0]]
  $region38: #{tpu_custom_call.1} parent=0
    _
  %s8 = ssub.s32 1, %s6
  %s9 = scalar_select 0, %s8, %s6
  %10 = sst [smem:[#allocation2]] %s4
  $region1: #{tpu_custom_call.1} parent=0
    #allocation3 [shape = 'u8[4096]{0}', space=vmem, size = 0x1000, scoped, tag = 'input window, operand 0, single buffered']
    #allocation4 [shape = 's32[1]{0}', space=sflag, size = 0x4, scoped, tag = 'scoped memory for tpu_custom_call.1']
    #allocation5 [shape = 's32[1]{0}', space=sflag, size = 0x4, scoped, tag = 'scoped memory for tpu_custom_call.1']
    #allocation6 [shape = 'u8[16384]{0}', space=vmem, size = 0x4000, scoped, tag = 'input window, operand 1, single buffered']
    #allocation7 [shape = 's32[1]{0}', space=sflag, size = 0x4, scoped, tag = 'scoped memory for tpu_custom_call.1']
    #allocation8 [shape = 'u8[512]{0}', space=vmem, size = 0x400, scoped, tag = 'output window, operand 0, single buffered']
    %11 = vsyncpa [#allocation4], 0
    %12 = vsyncpa [#allocation7], 0
    %13 = vsyncpa [#allocation5], 0
    // Predicated region
    $region2: #{tpu_custom_call.1} parent=1 // pred_check
      _
    $region3: #{tpu_custom_call.1} parent=1 // pred_check_branch
      %15 = sbr.rel (0) target = $region5
    $region4: #{tpu_custom_call.1} parent=1 // pred_region
      %s17 = ssub.s32 128, 128
      %18 = vsyncadd [#allocation4], %s17
      %s19 = sshll.u32 [#allocation3], 4
      %s20 = int_to_ptr.vmem [resolvable:$true] %s19
      %25 = dma.hbm_to_vmem [thread:$0]  %s0, 128, %s20, [#allocation4], 64, 64, 4
    $region5: #{tpu_custom_call.1} parent=1 // pred_fallthru
      _
    // Predicated region
    $region6: #{tpu_custom_call.1} parent=1 // pred_check
      _
    $region7: #{tpu_custom_call.1} parent=1 // pred_check_branch
      %27 = sbr.rel (0) target = $region9
    $region8: #{tpu_custom_call.1} parent=1 // pred_region
      %s29 = ssub.s32 512, 512
      %30 = vsyncadd [#allocation7], %s29
      %s31 = sshll.u32 [#allocation6], 4
      %s32 = int_to_ptr.vmem [resolvable:$true] %s31
      %37 = dma.hbm_to_vmem [thread:$0]  %s1, 512, %s32, [#allocation7], 128, 128, 8
    $region9: #{tpu_custom_call.1} parent=1 // pred_fallthru
      _
    // Predicated region
    $region10: #{tpu_custom_call.1} parent=1 // pred_check
      _
    $region11: #{tpu_custom_call.1} parent=1 // pred_check_branch
      %39 = sbr.rel (0) target = $region13
    $region12: #{tpu_custom_call.1} parent=1 // pred_region
      _
    $region13: #{tpu_custom_call.1} parent=1 // pred_fallthru
      _
    // Predicated region
    $region14: #{tpu_custom_call.1} parent=1 // pred_check
      _
    $region15: #{tpu_custom_call.1} parent=1 // pred_check_branch
      %41 = sbr.rel (0) target = $region17
    $region16: #{tpu_custom_call.1} parent=1 // pred_region
      _
    $region17: #{tpu_custom_call.1} parent=1 // pred_fallthru
      _
    // Predicated region
    $region18: #{tpu_custom_call.1} parent=1 // pred_check
      _
    $region19: #{tpu_custom_call.1} parent=1 // pred_check_branch
      %43 = sbr.rel (0) target = $region21
    $region20: #{tpu_custom_call.1} parent=1 // pred_region
      _
    $region21: #{tpu_custom_call.1} parent=1 // pred_fallthru
      _
    // Predicated region
    $region22: #{tpu_custom_call.1} parent=1 // pred_check
      _
    $region23: #{tpu_custom_call.1} parent=1 // pred_check_branch
      %45 = sbr.rel (0) target = $region25
    $region24: #{tpu_custom_call.1} parent=1 // pred_region
      %46 = dma.done [#allocation4], 128
    $region25: #{tpu_custom_call.1} parent=1 // pred_fallthru
      _
    // Predicated region
    $region26: #{tpu_custom_call.1} parent=1 // pred_check
      _
    $region27: #{tpu_custom_call.1} parent=1 // pred_check_branch
      %48 = sbr.rel (0) target = $region29
    $region28: #{tpu_custom_call.1} parent=1 // pred_region
      %49 = dma.done [#allocation7], 512
    $region29: #{tpu_custom_call.1} parent=1 // pred_fallthru
      _
    %v51 = vld [vmem:[#allocation3] sm:$0xf]
    %v52 = vld [vmem:[#allocation3 + $0x4] sm:$0xf]
    %v53 = vld [vmem:[#allocation6] sm:$0xff]
    %v54 = vld [vmem:[#allocation6 + $0x8] sm:$0xff]
    %v55 = vld [vmem:[#allocation6 + $0x10] sm:$0xff]
    %v56 = vld [vmem:[#allocation6 + $0x18] sm:$0xff]
    %v57 = vld [vmem:[%s2] sm:$0x3]
    %v59 = vlaneseq
    %v60 = vshrl.u32 %v59, 7
    %v61 = vsub.s32 0, %v60
    %v62 = vrot.slane %v57, %v61
    %v63 = vlaneseq
    %v64 = vshrl.u32 %v63, 7
    %v65 = vsub.s32 1, %v64
    %v66 = vrot.slane %v57, %v65
    %v71 = vunpack.c.l.b16 %v51
    %v72 = vunpack.c.l.b16 %v52
    %v73 = vpack.c.b16 %v72, %v71
    %v78 = vunpack.c.l.b16 %v53
    %v79 = vunpack.c.h.b16 %v53
    %v80 = vunpack.c.l.b16 %v54
    %v81 = vunpack.c.h.b16 %v54
    %v82 = vunpack.c.l.b16 %v55
    %v83 = vunpack.c.h.b16 %v55
    %v84 = vunpack.c.l.b16 %v56
    %v85 = vunpack.c.h.b16 %v56
    %v86 = vpack.c.b16 %v80, %v78
    %v87 = vpack.c.b16 %v81, %v79
    %v88 = vpack.c.b16 %v84, %v82
    %v89 = vpack.c.b16 %v85, %v83
    %vm94 = vcmask 261120
    %v96 = vsel %vm94, %v73, 0
    %98 = vmatprep.subr.bf16.mxu0 %v87
    %99 = vmatpush1.bf16.msra.mxu0 %v86
    %100 = vmatprep.subr.bf16.mxu0 %v89
    %101 = vmatpush1.bf16.msra.mxu0 %v88
    %102 = vmatprep.subr.bf16.mxu0 0
    %103 = vmatpush1.bf16.msra.mxu0 0
    %104 = vmatprep.subr.bf16.mxu0 0
    %105 = vmatpush1.bf16.msra.mxu0 0
    %106 = vmatprep.subr.bf16.mxu0 0
    %107 = vmatpush1.bf16.msra.mxu0 0
    %108 = vmatprep.subr.bf16.mxu0 0
    %109 = vmatpush1.bf16.msra.mxu0 0
    %110 = vmatprep.subr.bf16.mxu0 0
    %111 = vmatpush1.bf16.msra.mxu0 0
    %112 = vmatprep.subr.bf16.mxu0 0
    %113 = vmatpush1.bf16.msra.mxu0 0
    %114 = vmatprep.subr.bf16.mxu0 0
    %115 = vmatpush1.bf16.msra.mxu0 0
    %116 = vmatprep.subr.bf16.mxu0 0
    %117 = vmatpush1.bf16.msra.mxu0 0
    %118 = vmatprep.subr.bf16.mxu0 0
    %119 = vmatpush1.bf16.msra.mxu0 0
    %120 = vmatprep.subr.bf16.mxu0 0
    %121 = vmatpush1.bf16.msra.mxu0 0
    %122 = vmatprep.subr.bf16.mxu0 0
    %123 = vmatpush1.bf16.msra.mxu0 0
    %124 = vmatprep.subr.bf16.mxu0 0
    %125 = vmatpush1.bf16.msra.mxu0 0
    %126 = vmatprep.subr.bf16.mxu0 0
    %127 = vmatpush1.bf16.msra.mxu0 0
    %128 = vmatprep.subr.bf16.mxu0 0
    %129 = vmatpush1.bf16.msra.mxu0 0
    %130 = vmatprep.mubr.bf16.mxu0 0
    %131 = vmatmul.mubr.bf16.gmra.mrb[0].mxu0 %v96
    %v132 = vpop.f32.mrb[0].mxu0
    %v133 = vadd.f32 %v62, %v132
    %v134 = vpop.f32.mrb[0].mxu0
    %v135 = vadd.f32 %v66, %v134
    %v136 = vpop.f32.mrb[0].mxu0
    %v137 = vadd.f32 %v62, %v136
    %v138 = vpop.f32.mrb[0].mxu0
    %v139 = vadd.f32 %v66, %v138
    %140 = vdwg.mxu0
    %v141 = vmax.f32 %v133, 0.0
    %v142 = vmax.f32 %v135, 0.0
    %v143 = vmax.f32 %v137, 0.0
    %v144 = vmax.f32 %v139, 0.0
    %v145 = vld [vmem:[%s3] sm:$0x3]
    %s146 = sld [smem:[#allocation2]]
    %v147 = vstv %s146
    %v149 = vlaneseq
    %v150 = vshrl.u32 %v149, 7
    %v151 = vsub.s32 0, %v150
    %v152 = vrot.slane %v145, %v151
    %v153 = vlaneseq
    %v154 = vshrl.u32 %v153, 7
    %v155 = vsub.s32 1, %v154
    %v156 = vrot.slane %v145, %v155
    %159 = vmatprep.subr.mxu0 %v142
    %160 = vmatpush1.xpose.msra.mxu0 %v141
    %161 = vmatprep.subr.mxu0 %v144
    %162 = vmatpush1.xpose.msra.mxu0 %v143
    %163 = vmatprep.subr.mxu0 0.0
    %164 = vmatpush1.xpose.msra.mxu0 0.0
    %165 = vmatprep.subr.mxu0 0.0
    %166 = vmatpush1.xpose.msra.mxu0 0.0
    %167 = vmatprep.subr.mxu0 0.0
    %168 = vmatpush1.xpose.msra.mxu0 0.0
    %169 = vmatprep.subr.mxu0 0.0
    %170 = vmatpush1.xpose.msra.mxu0 0.0
    %171 = vmatprep.subr.mxu0 0.0
    %172 = vmatpush1.xpose.msra.mxu0 0.0
    %173 = vmatprep.subr.mxu0 0.0
    %174 = vmatpush1.xpose.msra.mxu0 0.0
    %175 = vmatprep.subr.mxu0 0.0
    %176 = vmatpush1.xpose.msra.mxu0 0.0
    %177 = vmatprep.subr.mxu0 0.0
    %178 = vmatpush1.xpose.msra.mxu0 0.0
    %179 = vmatprep.subr.mxu0 0.0
    %180 = vmatpush1.xpose.msra.mxu0 0.0
    %181 = vmatprep.subr.mxu0 0.0
    %182 = vmatpush1.xpose.msra.mxu0 0.0
    %183 = vmatprep.subr.mxu0 0.0
    %184 = vmatpush1.xpose.msra.mxu0 0.0
    %185 = vmatprep.subr.mxu0 0.0
    %186 = vmatpush1.xpose.msra.mxu0 0.0
    %187 = vmatprep.subr.mxu0 0.0
    %188 = vmatpush1.xpose.msra.mxu0 0.0
    %189 = vmatprep.subr.mxu0 0.0
    %190 = vmatpush1.xpose.msra.mxu0 0.0
    %191 = vmatprep.subr.mxu0 0.0
    %192 = vmatpush1.xpose.msra.mxu0 0.0
    %193 = vmatprep.subr.mxu0 0.0
    %194 = vmatpush1.xpose.msra.mxu0 0.0
    %195 = vmatprep.subr.mxu0 0.0
    %196 = vmatpush1.xpose.msra.mxu0 0.0
    %197 = vmatprep.subr.mxu0 0.0
    %198 = vmatpush1.xpose.msra.mxu0 0.0
    %199 = vmatprep.subr.mxu0 0.0
    %200 = vmatpush1.xpose.msra.mxu0 0.0
    %201 = vmatprep.subr.mxu0 0.0
    %202 = vmatpush1.xpose.msra.mxu0 0.0
    %203 = vmatprep.subr.mxu0 0.0
    %204 = vmatpush1.xpose.msra.mxu0 0.0
    %205 = vmatprep.subr.mxu0 0.0
    %206 = vmatpush1.xpose.msra.mxu0 0.0
    %207 = vmatprep.subr.mxu0 0.0
    %208 = vmatpush1.xpose.msra.mxu0 0.0
    %209 = vmatprep.subr.mxu0 0.0
    %210 = vmatpush1.xpose.msra.mxu0 0.0
    %211 = vmatprep.subr.mxu0 0.0
    %212 = vmatpush1.xpose.msra.mxu0 0.0
    %213 = vmatprep.subr.mxu0 0.0
    %214 = vmatpush1.xpose.msra.mxu0 0.0
    %215 = vmatprep.subr.mxu0 0.0
    %216 = vmatpush1.xpose.msra.mxu0 0.0
    %217 = vmatprep.subr.mxu0 0.0
    %218 = vmatpush1.xpose.msra.mxu0 0.0
    %219 = vmatprep.subr.mxu0 0.0
    %220 = vmatpush1.xpose.msra.mxu0 0.0
    %221 = vmatprep.subr.mxu0 0.0
    %222 = vmatpush1.xpose.msra.mxu0 0.0
    %223 = vmatprep.mubr.f32.mxu0 %v156
    %224 = vmatmul.mubr.f32.gmra.mrb[0].mxu0 %v152
    %v225 = vpop.f32.mrb[0].mxu0
    %v226 = vadd.f32 %v147, %v225
    %v227 = vpop.f32.mrb[0].mxu0
    %228 = vdwg.mxu0
    %vm229 = vcmask 122880
    %230 = vst.msk [vmem:[#allocation8] sm:$0x1] %vm229, %v226
    // Predicated region
    $region30: #{tpu_custom_call.1} parent=1 // pred_check
      _
    $region31: #{tpu_custom_call.1} parent=1 // pred_check_branch
      %232 = sbr.rel (0) target = $region33
    $region32: #{tpu_custom_call.1} parent=1 // pred_region
      %s234 = ssub.s32 16, 16
      %235 = vsyncadd [#allocation5], %s234
      %s237 = sshll.u32 [#allocation8], 4
      %s238 = int_to_ptr.vmem [resolvable:$true] %s237
      %240 = dma.vmem_to_hbm [thread:$0]  %s238, 16, %s5, [#allocation5]
    $region33: #{tpu_custom_call.1} parent=1 // pred_fallthru
      _
    // Predicated region
    $region34: #{tpu_custom_call.1} parent=1 // pred_check
      _
    $region35: #{tpu_custom_call.1} parent=1 // pred_check_branch
      %242 = sbr.rel (0) target = $region37
    $region36: #{tpu_custom_call.1} parent=1 // pred_region
      %243 = dma.done [#allocation5], 16
    $region37: #{tpu_custom_call.1} parent=1 // pred_fallthru
      _
    %244 = vsyncpa [#allocation4], 1
    %245 = vsyncpa [#allocation7], 1
    %246 = vsyncpa [#allocation5], 1

</llo_original>
